<compile_context>
chip_gen: v5e
topology: v5e:2x2
jax: 0.10.0
libtpu: 0.0.40
codegen_flags: <defaults>
</compile_context>

<pallas_src>
import functools

import jax
import jax.numpy as jnp
from jax.experimental import pallas as pl
from jax.experimental.pallas import tpu as pltpu

# --- model config (mirrors the PyTorch script) -------------------------------
LATENT_DIM = 64
OUTPUT_COLUMNS = ['cx', 'cy', 'cz', 'ox', 'oy', 'oz', 'sx', 'sy', 'sz']
OUTPUT_DIM = len(OUTPUT_COLUMNS)          # 9
HIDDEN_LAYERS = (128, 64)                 # `layers` argument of Decoder


def _round_up(x, m):
    return (x + m - 1) // m * m


# --- Pallas kernel ------------------------------------------------------------
def decoder_kernel(z_ref, w1_ref, b1_ref, w2_ref, b2_ref, w3_ref, b3_ref,
                   out_ref, *, compute_dtype):
    # Hidden layer 1: Linear + ReLU (MXU matmul, f32 accumulate; VPU epilogue).
    x = z_ref[...].astype(compute_dtype)
    h = jnp.dot(x, w1_ref[...].astype(compute_dtype),
                preferred_element_type=jnp.float32)
    h = jnp.maximum(h + b1_ref[...], 0.0)
    # Hidden layer 2: Linear + ReLU.
    h = jnp.dot(h.astype(compute_dtype), w2_ref[...].astype(compute_dtype),
                preferred_element_type=jnp.float32)
    h = jnp.maximum(h + b2_ref[...], 0.0)
    # Output layer: Linear, no activation.  Output block is (block_b, 9) —
    # narrow store straight to the real output columns (no padded slab).
    o = jnp.dot(h.astype(compute_dtype), w3_ref[...].astype(compute_dtype),
                preferred_element_type=jnp.float32)
    out_ref[...] = (o + b3_ref[...]).astype(out_ref.dtype)


@functools.partial(jax.jit, static_argnames=("block_b", "compute_dtype"))
def _decoder_pallas(z, w1, b1, w2, b2, w3, b3, *, block_b, compute_dtype):
    B, D = z.shape
    H1 = w1.shape[1]
    H2 = w2.shape[1]
    O = w3.shape[1]
    grid = (pl.cdiv(B, block_b),)          # boundary block masked by Pallas

    full = lambda shape: pl.BlockSpec(shape, lambda i: (0, 0))
    kernel = functools.partial(decoder_kernel, compute_dtype=compute_dtype)

    return pl.pallas_call(
        kernel,
        out_shape=jax.ShapeDtypeStruct((B, O), jnp.float32),
        grid=grid,
        in_specs=[
            # Streamed batch tile of z.  (If profiling shows exposed z DMA at
            # small tiles, bump with pipeline_mode=pl.Buffered(3).)
            pl.BlockSpec((block_b, D), lambda i: (i, 0)),
            full((D, H1)),  full((1, H1)),   # W1, b1 (VMEM-resident)
            full((H1, H2)), full((1, H2)),   # W2, b2 (VMEM-resident)
            full((H2, O)),  full((1, O)),    # W3, b3 (VMEM-resident)
        ],
        out_specs=pl.BlockSpec((block_b, O), lambda i: (i, 0)),
        compiler_params=pltpu.CompilerParams(
            dimension_semantics=("parallel",)),
    )(z, w1, b1, w2, b2, w3, b3)


def decoder_forward(z, w1, b1, w2, b2, w3, b3, *, block_b=2048, use_bf16=False):
    """Fused Decoder forward.  No host-side padding or slicing passes."""
    B = z.shape[0]

    # Batch tile: multiple of 8, no larger than the batch (boundary block is
    # masked by Pallas).  Tiny batches (<8) fall back to one masked 8-row tile.
    if B >= 8:
        bb = min(block_b, (B // 8) * 8)
    else:
        bb = 8
    # Guarantee >= 2 grid steps for mid/large batches so the "parallel" batch
    # axis spans both TensorCores on v7x (harmless on v5e/v6e).
    if B >= 256 and pl.cdiv(B, bb) < 2:
        bb = _round_up(pl.cdiv(B, 2), 8)

    compute_dtype = "bfloat16" if use_bf16 else "float32"
    return _decoder_pallas(z, w1, b1, w2, b2, w3, b3,
                           block_b=bb, compute_dtype=compute_dtype)


# --- deterministic parameter init (PyTorch nn.Linear style) -------------------
def init_linear(key, fan_in, fan_out):
    k_w, k_b = jax.random.split(key)
    bound = 1.0 / jnp.sqrt(float(fan_in))
    # Stored as (in, out)  ==  PyTorch weight (out, in) transposed.
    w = jax.random.uniform(k_w, (fan_in, fan_out), jnp.float32, -bound, bound)
    b = jax.random.uniform(k_b, (1, fan_out), jnp.float32, -bound, bound)
    return w, b


def _reference(z, w1, b1, w2, b2, w3, b3):
    h = jnp.maximum(z @ w1 + b1, 0.0)
    h = jnp.maximum(h @ w2 + b2, 0.0)
    return h @ w3 + b3


if __name__ == "__main__":
    key = jax.random.PRNGKey(0)
    k_z, k_z2, k1, k2, k3 = jax.random.split(key, 5)

    w1, b1 = init_linear(k1, LATENT_DIM, HIDDEN_LAYERS[0])
    w2, b2 = init_linear(k2, HIDDEN_LAYERS[0], HIDDEN_LAYERS[1])
    w3, b3 = init_linear(k3, HIDDEN_LAYERS[1], OUTPUT_DIM)

    # Test 1: small batch (single grid step, exact tile).
    batch = 8
    z = jax.random.normal(k_z, (batch, LATENT_DIM), jnp.float32)
    out = jax.block_until_ready(decoder_forward(z, w1, b1, w2, b2, w3, b3))
    ref = _reference(z, w1, b1, w2, b2, w3, b3)
    assert out.shape == (batch, OUTPUT_DIM)
    assert jnp.allclose(out, ref, atol=1e-4, rtol=1e-4), "mismatch vs reference (B=8)"

    # Test 2: ragged batch -> multi-step grid with a masked partial final block
    # (bb = 16, blocks of rows [0:16) and [16:20)), no host-side pad/slice.
    batch2 = 20
    z2 = jax.random.normal(k_z2, (batch2, LATENT_DIM), jnp.float32)
    out2 = jax.block_until_ready(decoder_forward(z2, w1, b1, w2, b2, w3, b3))
    ref2 = _reference(z2, w1, b1, w2, b2, w3, b3)
    assert out2.shape == (batch2, OUTPUT_DIM)
    assert jnp.allclose(out2, ref2, atol=1e-4, rtol=1e-4), "mismatch vs reference (B=20)"

    # Test 3: bf16 MXU-input path (v7x throughput option) — smoke test only.
    out3 = jax.block_until_ready(
        decoder_forward(z2, w1, b1, w2, b2, w3, b3, use_bf16=True))
    assert out3.shape == (batch2, OUTPUT_DIM)
    assert bool(jnp.all(jnp.isfinite(out3))), "non-finite output (bf16 path)"

    print("KERNEL_OK")
</pallas_src>

<mosaic_0001>
module attributes {stable_mosaic.version = 11 : i64} {
  func.func @decoder_kernel(%arg0: i32, %arg1: memref<8x64xf32, #tpu.memory_space<vmem>>, %arg2: memref<64x128xf32, #tpu.memory_space<vmem>>, %arg3: memref<1x128xf32, #tpu.memory_space<vmem>>, %arg4: memref<128x64xf32, #tpu.memory_space<vmem>>, %arg5: memref<1x64xf32, #tpu.memory_space<vmem>>, %arg6: memref<64x9xf32, #tpu.memory_space<vmem>>, %arg7: memref<1x9xf32, #tpu.memory_space<vmem>>, %arg8: memref<8x9xf32, #tpu.memory_space<vmem>>) attributes {dimension_semantics = [#tpu.dimension_semantics<parallel>], iteration_bounds = array<i64: 1>, scalar_prefetch = 0 : i64, scratch_operands = 0 : i64, tpu.core_type = #tpu.core_type<tc>, window_params = [{transform_indices = @transform_0, window_bounds = array<i64: 8, 64>}, {pipeline_mode = #tpu.pipeline_mode<synchronous>, transform_indices = @transform_1, window_bounds = array<i64: 64, 128>}, {pipeline_mode = #tpu.pipeline_mode<synchronous>, transform_indices = @transform_2, window_bounds = array<i64: 1, 128>}, {pipeline_mode = #tpu.pipeline_mode<synchronous>, transform_indices = @transform_3, window_bounds = array<i64: 128, 64>}, {pipeline_mode = #tpu.pipeline_mode<synchronous>, transform_indices = @transform_4, window_bounds = array<i64: 1, 64>}, {pipeline_mode = #tpu.pipeline_mode<synchronous>, transform_indices = @transform_5, window_bounds = array<i64: 64, 9>}, {pipeline_mode = #tpu.pipeline_mode<synchronous>, transform_indices = @transform_6, window_bounds = array<i64: 1, 9>}, {transform_indices = @transform_7, window_bounds = array<i64: 8, 9>}]} {
    %c0 = arith.constant 0 : index
    %c0_0 = arith.constant 0 : index
    %0 = vector.load %arg1[%c0, %c0_0] : memref<8x64xf32, #tpu.memory_space<vmem>>, vector<8x64xf32>
    %c0_1 = arith.constant 0 : index
    %c0_2 = arith.constant 0 : index
    %1 = vector.load %arg2[%c0_1, %c0_2] : memref<64x128xf32, #tpu.memory_space<vmem>>, vector<64x128xf32>
    %cst = arith.constant dense<0.000000e+00> : vector<8x128xf32>
    %2 = tpu.matmul %0, %1, %cst {dimension_numbers = #tpu.dot_dimension_numbers<[1], [0], [0], [1], [0, 0, 1, 1], [], []>} : vector<8x64xf32>, vector<64x128xf32>, vector<8x128xf32> -> vector<8x128xf32>
    %c0_3 = arith.constant 0 : index
    %c0_4 = arith.constant 0 : index
    %3 = vector.load %arg3[%c0_3, %c0_4] : memref<1x128xf32, #tpu.memory_space<vmem>>, vector<1x128xf32>
    %4 = vector.broadcast %3 : vector<1x128xf32> to vector<8x128xf32>
    %5 = arith.addf %2, %4 : vector<8x128xf32>
    %cst_5 = arith.constant 0.000000e+00 : f32
    %6 = vector.broadcast %cst_5 : f32 to vector<8x128xf32>
    %7 = arith.maximumf %5, %6 : vector<8x128xf32>
    %c0_6 = arith.constant 0 : index
    %c0_7 = arith.constant 0 : index
    %8 = vector.load %arg4[%c0_6, %c0_7] : memref<128x64xf32, #tpu.memory_space<vmem>>, vector<128x64xf32>
    %cst_8 = arith.constant dense<0.000000e+00> : vector<8x64xf32>
    %9 = tpu.matmul %7, %8, %cst_8 {dimension_numbers = #tpu.dot_dimension_numbers<[1], [0], [0], [1], [0, 0, 1, 1], [], []>} : vector<8x128xf32>, vector<128x64xf32>, vector<8x64xf32> -> vector<8x64xf32>
    %c0_9 = arith.constant 0 : index
    %c0_10 = arith.constant 0 : index
    %10 = vector.load %arg5[%c0_9, %c0_10] : memref<1x64xf32, #tpu.memory_space<vmem>>, vector<1x64xf32>
    %11 = vector.broadcast %10 : vector<1x64xf32> to vector<8x64xf32>
    %12 = arith.addf %9, %11 : vector<8x64xf32>
    %cst_11 = arith.constant 0.000000e+00 : f32
    %13 = vector.broadcast %cst_11 : f32 to vector<8x64xf32>
    %14 = arith.maximumf %12, %13 : vector<8x64xf32>
    %c0_12 = arith.constant 0 : index
    %c0_13 = arith.constant 0 : index
    %15 = vector.load %arg6[%c0_12, %c0_13] : memref<64x9xf32, #tpu.memory_space<vmem>>, vector<64x9xf32>
    %cst_14 = arith.constant dense<0.000000e+00> : vector<8x9xf32>
    %16 = tpu.matmul %14, %15, %cst_14 {dimension_numbers = #tpu.dot_dimension_numbers<[1], [0], [0], [1], [0, 0, 1, 1], [], []>} : vector<8x64xf32>, vector<64x9xf32>, vector<8x9xf32> -> vector<8x9xf32>
    %c0_15 = arith.constant 0 : index
    %c0_16 = arith.constant 0 : index
    %17 = vector.load %arg7[%c0_15, %c0_16] : memref<1x9xf32, #tpu.memory_space<vmem>>, vector<1x9xf32>
    %18 = vector.broadcast %17 : vector<1x9xf32> to vector<8x9xf32>
    %19 = arith.addf %16, %18 : vector<8x9xf32>
    %c0_17 = arith.constant 0 : index
    %c0_18 = arith.constant 0 : index
    %20 = vector.load %arg8[%c0_17, %c0_18] : memref<8x9xf32, #tpu.memory_space<vmem>>, vector<8x9xf32>
    tpu.vector_store %arg8[%c0_17, %c0_18], %19 {strides = array<i32>} : memref<8x9xf32, #tpu.memory_space<vmem>>, vector<8x9xf32>,
    return
  }
  func.func @transform_0(%arg0: i32) -> (i32, i32) {
    %c0_i32 = arith.constant 0 : i32
    %c0_i32_0 = arith.constant 0 : i32
    return %arg0, %c0_i32 : i32, i32
  }
  func.func @transform_1(%arg0: i32) -> (i32, i32) {
    %c0_i32 = arith.constant 0 : i32
    %c0_i32_0 = arith.constant 0 : i32
    %c0_i32_1 = arith.constant 0 : i32
    return %c0_i32, %c0_i32_0 : i32, i32
  }
  func.func @transform_2(%arg0: i32) -> (i32, i32) {
    %c0_i32 = arith.constant 0 : i32
    %c0_i32_0 = arith.constant 0 : i32
    %c0_i32_1 = arith.constant 0 : i32
    return %c0_i32, %c0_i32_0 : i32, i32
  }
  func.func @transform_3(%arg0: i32) -> (i32, i32) {
    %c0_i32 = arith.constant 0 : i32
    %c0_i32_0 = arith.constant 0 : i32
    %c0_i32_1 = arith.constant 0 : i32
    return %c0_i32, %c0_i32_0 : i32, i32
  }
  func.func @transform_4(%arg0: i32) -> (i32, i32) {
    %c0_i32 = arith.constant 0 : i32
    %c0_i32_0 = arith.constant 0 : i32
    %c0_i32_1 = arith.constant 0 : i32
    return %c0_i32, %c0_i32_0 : i32, i32
  }
  func.func @transform_5(%arg0: i32) -> (i32, i32) {
    %c0_i32 = arith.constant 0 : i32
    %c0_i32_0 = arith.constant 0 : i32
    %c0_i32_1 = arith.constant 0 : i32
    return %c0_i32, %c0_i32_0 : i32, i32
  }
  func.func @transform_6(%arg0: i32) -> (i32, i32) {
    %c0_i32 = arith.constant 0 : i32
    %c0_i32_0 = arith.constant 0 : i32
    %c0_i32_1 = arith.constant 0 : i32
    return %c0_i32, %c0_i32_0 : i32, i32
  }
  func.func @transform_7(%arg0: i32) -> (i32, i32) {
    %c0_i32 = arith.constant 0 : i32
    %c0_i32_0 = arith.constant 0 : i32
    return %arg0, %c0_i32 : i32, i32
  }
}

</mosaic_0001>

<llo_original>
// kernel: _decoder_pallas.1
$region0: #{_decoder_pallas.1}
  #allocation0 [shape = 'u32[]', space=smem, size = 0x4, offset = 0x4, fixed_abs, tag = 'smem constant byte address 0x4 - core index']
  #allocation1 [shape = 'u32[72,128]{1,0:T(1,128)}', space=vmem, size = 0x9000, scoped, tag = 'internal scratch']
  %s0 = inlined_call_operand.vmem [shape: f32[8,64], index: 0, kind: input, shape index: {}]
  %s1 = inlined_call_operand.vmem [shape: f32[64,128], index: 1, kind: input, shape index: {}]
  %s2 = inlined_call_operand.vmem [shape: f32[1,128], index: 2, kind: input, shape index: {}]
  %s3 = inlined_call_operand.vmem [shape: f32[128,64], index: 3, kind: input, shape index: {}]
  %s4 = inlined_call_operand.vmem [shape: f32[1,64], index: 4, kind: input, shape index: {}]
  %s5 = inlined_call_operand.vmem [shape: f32[64,9], index: 5, kind: input, shape index: {}]
  %s6 = inlined_call_operand.vmem [shape: f32[1,9], index: 6, kind: input, shape index: {}]
  %s7 = inlined_call_operand.hbm [shape: f32[8,9], index: 7, kind: output, shape index: {}]
  %s8 = sld [smem:[#allocation0]]
  $region38: #{_decoder_pallas.1} parent=0
    _
  %s10 = ssub.s32 1, %s8
  %s11 = scalar_select 0, %s10, %s8
  $region1: #{_decoder_pallas.1} parent=0
    #allocation2 [shape = 'u8[4096]{0}', space=vmem, size = 0x1000, scoped, tag = 'output window, operand 0, single buffered']
    #allocation3 [shape = 's32[1]{0}', space=sflag, size = 0x4, scoped, tag = 'scoped memory for _decoder_pallas.1']
    %12 = vsyncpa [#allocation3], 0
    // Predicated region
    $region2: #{_decoder_pallas.1} parent=1 // pred_check
      _
    $region3: #{_decoder_pallas.1} parent=1 // pred_check_branch
      %14 = sbr.rel (0) target = $region5
    $region4: #{_decoder_pallas.1} parent=1 // pred_region
      _
    $region5: #{_decoder_pallas.1} parent=1 // pred_fallthru
      _
    // Predicated region
    $region6: #{_decoder_pallas.1} parent=1 // pred_check
      _
    $region7: #{_decoder_pallas.1} parent=1 // pred_check_branch
      %16 = sbr.rel (0) target = $region9
    $region8: #{_decoder_pallas.1} parent=1 // pred_region
      _
    $region9: #{_decoder_pallas.1} parent=1 // pred_fallthru
      _
    // Predicated region
    $region10: #{_decoder_pallas.1} parent=1 // pred_check
      _
    $region11: #{_decoder_pallas.1} parent=1 // pred_check_branch
      %18 = sbr.rel (0) target = $region13
    $region12: #{_decoder_pallas.1} parent=1 // pred_region
      _
    $region13: #{_decoder_pallas.1} parent=1 // pred_fallthru
      _
    // Predicated region
    $region14: #{_decoder_pallas.1} parent=1 // pred_check
      _
    $region15: #{_decoder_pallas.1} parent=1 // pred_check_branch
      %20 = sbr.rel (0) target = $region17
    $region16: #{_decoder_pallas.1} parent=1 // pred_region
      _
    $region17: #{_decoder_pallas.1} parent=1 // pred_fallthru
      _
    // Predicated region
    $region18: #{_decoder_pallas.1} parent=1 // pred_check
      _
    $region19: #{_decoder_pallas.1} parent=1 // pred_check_branch
      %22 = sbr.rel (0) target = $region21
    $region20: #{_decoder_pallas.1} parent=1 // pred_region
      _
    $region21: #{_decoder_pallas.1} parent=1 // pred_fallthru
      _
    // Predicated region
    $region22: #{_decoder_pallas.1} parent=1 // pred_check
      _
    $region23: #{_decoder_pallas.1} parent=1 // pred_check_branch
      %24 = sbr.rel (0) target = $region25
    $region24: #{_decoder_pallas.1} parent=1 // pred_region
      _
    $region25: #{_decoder_pallas.1} parent=1 // pred_fallthru
      _
    // Predicated region
    $region26: #{_decoder_pallas.1} parent=1 // pred_check
      _
    $region27: #{_decoder_pallas.1} parent=1 // pred_check_branch
      %26 = sbr.rel (0) target = $region29
    $region28: #{_decoder_pallas.1} parent=1 // pred_region
      _
    $region29: #{_decoder_pallas.1} parent=1 // pred_fallthru
      _
    %v27 = vld [vmem:[%s0] sm:$0xff]
    %v28 = vld [vmem:[%s1] sm:$0xff]
    %v29 = vld [vmem:[%s1 + $0x8] sm:$0xff]
    %v30 = vld [vmem:[%s1 + $0x10] sm:$0xff]
    %v31 = vld [vmem:[%s1 + $0x18] sm:$0xff]
    %v32 = vld [vmem:[%s1 + $0x20] sm:$0xff]
    %v33 = vld [vmem:[%s1 + $0x28] sm:$0xff]
    %v34 = vld [vmem:[%s1 + $0x30] sm:$0xff]
    %v35 = vld [vmem:[%s1 + $0x38] sm:$0xff]
    %v36 = vld [vmem:[%s2] sm:$0x1]
    %v38 = vperm.slane %v36, 0
    %vm40 = vcmask 523264
    %v42 = vsel %vm40, %v27, 0
    %44 = vmatpush.msra.mxu0 0.0
    %45 = vmatpush.msra.mxu0 0.0
    %46 = vmatpush.msra.mxu0 0.0
    %47 = vmatpush.msra.mxu0 0.0
    %48 = vmatpush.msra.mxu0 0.0
    %49 = vmatpush.msra.mxu0 0.0
    %50 = vmatpush.msra.mxu0 0.0
    %51 = vmatpush.msra.mxu0 0.0
    %52 = vmatpush.msra.mxu0 %v35
    %53 = vmatpush.msra.mxu0 %v34
    %54 = vmatpush.msra.mxu0 %v33
    %55 = vmatpush.msra.mxu0 %v32
    %56 = vmatpush.msra.mxu0 %v31
    %57 = vmatpush.msra.mxu0 %v30
    %58 = vmatpush.msra.mxu0 %v29
    %59 = vmatpush.msra.mxu0 %v28
    %60 = vmatmul.f32.gmra.mxu0 %v42
    %v61 = vpop.f32.mrf.mxu0
    %v62 = vadd.f32 %v38, %v61
    %63 = vdwg.mxu0
    %v64 = vmax.f32 %v62, 0.0
    %v65 = vld [vmem:[%s3] sm:$0xff]
    %v66 = vld [vmem:[%s3 + $0x8] sm:$0xff]
    %v67 = vld [vmem:[%s3 + $0x10] sm:$0xff]
    %v68 = vld [vmem:[%s3 + $0x18] sm:$0xff]
    %v69 = vld [vmem:[%s3 + $0x20] sm:$0xff]
    %v70 = vld [vmem:[%s3 + $0x28] sm:$0xff]
    %v71 = vld [vmem:[%s3 + $0x30] sm:$0xff]
    %v72 = vld [vmem:[%s3 + $0x38] sm:$0xff]
    %v73 = vld [vmem:[%s3 + $0x40] sm:$0xff]
    %v74 = vld [vmem:[%s3 + $0x48] sm:$0xff]
    %v75 = vld [vmem:[%s3 + $0x50] sm:$0xff]
    %v76 = vld [vmem:[%s3 + $0x58] sm:$0xff]
    %v77 = vld [vmem:[%s3 + $0x60] sm:$0xff]
    %v78 = vld [vmem:[%s3 + $0x68] sm:$0xff]
    %v79 = vld [vmem:[%s3 + $0x70] sm:$0xff]
    %v80 = vld [vmem:[%s3 + $0x78] sm:$0xff]
    %v81 = vld [vmem:[%s4] sm:$0x1]
    %v83 = vperm.slane %v81, 0
    %85 = vmatpush.msra.mxu0 %v80
    %86 = vmatpush.msra.mxu0 %v79
    %87 = vmatpush.msra.mxu0 %v78
    %88 = vmatpush.msra.mxu0 %v77
    %89 = vmatpush.msra.mxu0 %v76
    %90 = vmatpush.msra.mxu0 %v75
    %91 = vmatpush.msra.mxu0 %v74
    %92 = vmatpush.msra.mxu0 %v73
    %93 = vmatpush.msra.mxu0 %v72
    %94 = vmatpush.msra.mxu0 %v71
    %95 = vmatpush.msra.mxu0 %v70
    %96 = vmatpush.msra.mxu0 %v69
    %97 = vmatpush.msra.mxu0 %v68
    %98 = vmatpush.msra.mxu0 %v67
    %99 = vmatpush.msra.mxu0 %v66
    %100 = vmatpush.msra.mxu0 %v65
    %101 = vmatmul.f32.gmra.mxu0 %v64
    %v102 = vpop.f32.mrf.mxu0
    %v103 = vadd.f32 %v83, %v102
    %104 = vdwg.mxu0
    %v105 = vmax.f32 %v103, 0.0
    %v106 = vld [vmem:[%s5] sm:$0xff]
    %v107 = vld [vmem:[%s5 + $0x8] sm:$0xff]
    %v108 = vld [vmem:[%s5 + $0x10] sm:$0xff]
    %v109 = vld [vmem:[%s5 + $0x18] sm:$0xff]
    %v110 = vld [vmem:[%s5 + $0x20] sm:$0xff]
    %v111 = vld [vmem:[%s5 + $0x28] sm:$0xff]
    %v112 = vld [vmem:[%s5 + $0x30] sm:$0xff]
    %v113 = vld [vmem:[%s5 + $0x38] sm:$0xff]
    %v114 = vld [vmem:[%s6] sm:$0x1]
    %v116 = vperm.slane %v114, 0
    %v119 = vsel %vm40, %v105, 0
    %121 = vmatpush.msra.mxu0 0.0
    %122 = vmatpush.msra.mxu0 0.0
    %123 = vmatpush.msra.mxu0 0.0
    %124 = vmatpush.msra.mxu0 0.0
    %125 = vmatpush.msra.mxu0 0.0
    %126 = vmatpush.msra.mxu0 0.0
    %127 = vmatpush.msra.mxu0 0.0
    %128 = vmatpush.msra.mxu0 0.0
    %129 = vmatpush.msra.mxu0 %v113
    %130 = vmatpush.msra.mxu0 %v112
    %131 = vmatpush.msra.mxu0 %v111
    %132 = vmatpush.msra.mxu0 %v110
    %133 = vmatpush.msra.mxu0 %v109
    %134 = vmatpush.msra.mxu0 %v108
    %135 = vmatpush.msra.mxu0 %v107
    %136 = vmatpush.msra.mxu0 %v106
    %137 = vmatmul.f32.gmra.mxu0 %v119
    %v138 = vpop.f32.mrf.mxu0
    %v139 = vadd.f32 %v116, %v138
    %140 = vdwg.mxu0
    %vm141 = vcmask 72704
    %142 = vst.msk [vmem:[#allocation2] sm:$0xff] %vm141, %v139
    // Predicated region
    $region30: #{_decoder_pallas.1} parent=1 // pred_check
      _
    $region31: #{_decoder_pallas.1} parent=1 // pred_check_branch
      %144 = sbr.rel (0) target = $region33
    $region32: #{_decoder_pallas.1} parent=1 // pred_region
      %146 = vsyncadd [#allocation3], 0
      %s148 = sshll.u32 [#allocation2], 4
      %s149 = int_to_ptr.vmem [resolvable:$true] %s148
      %s150 = sshll.u32 %s7, 4
      %s151 = int_to_ptr.hbm [resolvable:$true] %s150
      %153 = dma.vmem_to_hbm [thread:$0]  %s149, 128, %s151, [#allocation3]
    $region33: #{_decoder_pallas.1} parent=1 // pred_fallthru
      _
    // Predicated region
    $region34: #{_decoder_pallas.1} parent=1 // pred_check
      _
    $region35: #{_decoder_pallas.1} parent=1 // pred_check_branch
      %155 = sbr.rel (0) target = $region37
    $region36: #{_decoder_pallas.1} parent=1 // pred_region
      %157 = dma.done [#allocation3], 128
    $region37: #{_decoder_pallas.1} parent=1 // pred_fallthru
      _
    %158 = vsyncpa [#allocation3], 1

</llo_original>
